<compile_context>
chip_gen: v7x
topology: tpu7x:2x2x1
jax: 0.10.0
libtpu: 0.0.40
codegen_flags: <defaults>
</compile_context>

<pallas_src>
import math

import jax
import jax.numpy as jnp
from jax.experimental import pallas as pl
from jax.experimental.pallas import tpu as pltpu

M = 2                      # angular margin (module default)
PI_CONST = 3.14159265      # literal used in the PyTorch code

# k = floor(M * arccos(ct) / PI_CONST) for M=2 only takes values {0, 1, 2}:
#   k >= 1  <=>  arccos(ct) >= PI_CONST/2  <=>  ct <= cos(PI_CONST/2)
#   k >= 2  <=>  arccos(ct) >= PI_CONST    <=>  ct <= cos(PI_CONST)
_T1 = math.cos(PI_CONST / 2.0)
_T2 = math.cos(PI_CONST)


def angle_linear_kernel(x_ref, w_ref, scale_ref, xlen_ref, inv_xlen_ref,
                        cos_ref, phi_ref):
    # MXU matmul in the inputs' native dtype, f32 accumulation.
    logits = jnp.dot(x_ref[...], w_ref[...],
                     preferred_element_type=jnp.float32)       # (TB, TO)

    col_scale = scale_ref[...]                                 # (1, TO) = factor / wlen
    xlen = xlen_ref[...]                                       # (TB, 1)
    inv_xlen = inv_xlen_ref[...]                               # (TB, 1), exact 1/xlen

    ct = logits * col_scale * inv_xlen
    ct = jnp.clip(ct, -1.0, 1.0)

    # cos(2*theta) = 2*cos^2(theta) - 1
    cos_m_theta = 2.0 * ct * ct - 1.0

    # k and (-1)^k via two VPU compares (replaces arccos / floor / mod)
    k1 = (ct <= _T1).astype(jnp.float32)
    k2 = (ct <= _T2).astype(jnp.float32)
    k = k1 + k2                                 # in {0, 1, 2}
    sign = 1.0 - 2.0 * (k1 - k2)                # +1 for k in {0, 2}, -1 for k == 1
    phi = sign * cos_m_theta - 2.0 * k

    cos_ref[...] = (ct * xlen).astype(cos_ref.dtype)
    phi_ref[...] = (phi * xlen).astype(phi_ref.dtype)


def _pick_tiles(B, F, O, x_itemsize, w_itemsize, budget_bytes=24 * 1024 * 1024):
    """Largest aligned (TB, TO) whose double-buffered working set fits VMEM."""
    tb_cands = [c for c in (256, 128, 64, 32, 16, 8) if B % c == 0] or [B]
    to_cands = [c for c in (512, 256, 128) if O % c == 0] or [O]
    for to in to_cands:
        for tb in tb_cands:
            need = 2 * (tb * F * x_itemsize      # x block
                        + F * to * w_itemsize    # weight block
                        + to * 4                 # col scale
                        + 2 * tb * 4             # xlen + inv_xlen
                        + 2 * tb * to * 4)       # two f32 outputs
            if need <= budget_bytes:
                return tb, to
    return tb_cands[-1], to_cands[-1]


def angle_linear(x, weight):
    B, F = x.shape
    F2, O = weight.shape
    assert F == F2

    # --- one-time / off-hot-path prep in XLA --------------------------------
    w32 = weight.astype(jnp.float32)
    wnorm = jnp.sqrt(jnp.sum(w32 * w32, axis=0, keepdims=True))        # (1, O)
    factor = jnp.where(wnorm > 1e-5, 1e-5 / wnorm, 1.0) * 1e5
    wlen = wnorm * factor                          # == ||w * factor|| per column
    col_scale = (factor / wlen).astype(jnp.float32)                    # (1, O)

    x32 = x.astype(jnp.float32)
    ss = jnp.sum(x32 * x32, axis=1, keepdims=True)                     # (B, 1)
    xlen = jnp.sqrt(ss)                                                # module output
    inv_xlen = jax.lax.rsqrt(ss)                                       # exact-enough 1/xlen

    # --- tiled pallas_call over (B, O) --------------------------------------
    TB, TO = _pick_tiles(B, F, O, x.dtype.itemsize, weight.dtype.itemsize)
    grid = (B // TB, O // TO)

    cos_t, phi_t = pl.pallas_call(
        angle_linear_kernel,
        out_shape=(
            jax.ShapeDtypeStruct((B, O), jnp.float32),
            jax.ShapeDtypeStruct((B, O), jnp.float32),
        ),
        grid=grid,
        in_specs=[
            pl.BlockSpec((TB, F), lambda i, j: (i, 0)),    # x (native dtype)
            pl.BlockSpec((F, TO), lambda i, j: (0, j)),    # weight (native dtype)
            pl.BlockSpec((1, TO), lambda i, j: (0, j)),    # per-column scale
            pl.BlockSpec((TB, 1), lambda i, j: (i, 0)),    # row norms
            pl.BlockSpec((TB, 1), lambda i, j: (i, 0)),    # reciprocal row norms
        ],
        out_specs=(
            pl.BlockSpec((TB, TO), lambda i, j: (i, j)),
            pl.BlockSpec((TB, TO), lambda i, j: (i, j)),
        ),
        compiler_params=pltpu.CompilerParams(
            dimension_semantics=("parallel", "parallel")),
    )(x, weight, col_scale, xlen, inv_xlen)

    return cos_t, phi_t, xlen


def angle_linear_ref(x, weight):
    # pure-JAX reference mirroring the PyTorch forward (phiflag=True, m=2)
    wnorm = jnp.sqrt(jnp.sum(weight * weight, axis=0, keepdims=True))
    ww = weight * jnp.where(wnorm > 1e-5, 1e-5 / wnorm, 1.0) * 1e5
    xlen = jnp.sqrt(jnp.sum(x * x, axis=1, keepdims=True))
    wlen = jnp.sqrt(jnp.sum(ww * ww, axis=0, keepdims=True))
    ct = jnp.clip(x @ ww / xlen / wlen, -1.0, 1.0)
    cmt = 2.0 * ct * ct - 1.0
    theta = jnp.arccos(ct)
    k = jnp.floor(M * theta / PI_CONST)
    phi = (1.0 - 2.0 * jnp.mod(k, 2.0)) * cmt - 2.0 * k
    return ct * xlen, phi * xlen, xlen


if __name__ == "__main__":
    # Small shapes; OUT=384 gives a multi-step (1, 3) grid to exercise tiling.
    B, IN_FEATURES, OUT_FEATURES = 16, 32, 384

    key = jax.random.PRNGKey(0)
    kx, kw = jax.random.split(key)

    x = jax.random.normal(kx, (B, IN_FEATURES), dtype=jnp.float32)
    # weight init per __init__: uniform(-1,1) then renorm(2,1,1e-5).mul(1e5)
    w_raw = jax.random.uniform(kw, (IN_FEATURES, OUT_FEATURES),
                               dtype=jnp.float32, minval=-1.0, maxval=1.0)
    w_colnorm = jnp.sqrt(jnp.sum(w_raw * w_raw, axis=0, keepdims=True))
    weight = w_raw * jnp.where(w_colnorm > 1e-5, 1e-5 / w_colnorm, 1.0) * 1e5

    cos_t, phi_t, xlen = jax.block_until_ready(angle_linear(x, weight))

    cos_r, phi_r, xlen_r = angle_linear_ref(x, weight)
    assert jnp.allclose(cos_t, cos_r, atol=2e-4, rtol=2e-4), "cos_theta mismatch"
    assert jnp.allclose(phi_t, phi_r, atol=2e-4, rtol=2e-4), "phi_theta mismatch"
    assert jnp.allclose(xlen, xlen_r, atol=1e-5, rtol=1e-5), "xlen mismatch"

    print("KERNEL_OK")
</pallas_src>

<mosaic_0001>
module attributes {stable_mosaic.version = 11 : i64} {
  func.func @angle_linear_kernel(%arg0: i32, %arg1: i32, %arg2: memref<16x32xf32, #tpu.memory_space<vmem>>, %arg3: memref<32x128xf32, #tpu.memory_space<vmem>>, %arg4: memref<1x128xf32, #tpu.memory_space<vmem>>, %arg5: memref<16x1xf32, #tpu.memory_space<vmem>>, %arg6: memref<16x1xf32, #tpu.memory_space<vmem>>, %arg7: memref<16x128xf32, #tpu.memory_space<vmem>>, %arg8: memref<16x128xf32, #tpu.memory_space<vmem>>) attributes {dimension_semantics = [#tpu.dimension_semantics<parallel>, #tpu.dimension_semantics<parallel>], iteration_bounds = array<i64: 1, 3>, scalar_prefetch = 0 : i64, scratch_operands = 0 : i64, tpu.core_type = #tpu.core_type<tc>, window_params = [{transform_indices = @transform_0, window_bounds = array<i64: 16, 32>}, {transform_indices = @transform_1, window_bounds = array<i64: 32, 128>}, {transform_indices = @transform_2, window_bounds = array<i64: 1, 128>}, {transform_indices = @transform_3, window_bounds = array<i64: 16, 1>}, {transform_indices = @transform_4, window_bounds = array<i64: 16, 1>}, {transform_indices = @transform_5, window_bounds = array<i64: 16, 128>}, {transform_indices = @transform_6, window_bounds = array<i64: 16, 128>}]} {
    %c0 = arith.constant 0 : index
    %c0_0 = arith.constant 0 : index
    %0 = vector.load %arg2[%c0, %c0_0] : memref<16x32xf32, #tpu.memory_space<vmem>>, vector<16x32xf32>
    %c0_1 = arith.constant 0 : index
    %c0_2 = arith.constant 0 : index
    %1 = vector.load %arg3[%c0_1, %c0_2] : memref<32x128xf32, #tpu.memory_space<vmem>>, vector<32x128xf32>
    %cst = arith.constant dense<0.000000e+00> : vector<16x128xf32>
    %2 = tpu.matmul %0, %1, %cst {dimension_numbers = #tpu.dot_dimension_numbers<[1], [0], [0], [1], [0, 0, 1, 1], [], []>} : vector<16x32xf32>, vector<32x128xf32>, vector<16x128xf32> -> vector<16x128xf32>
    %c0_3 = arith.constant 0 : index
    %c0_4 = arith.constant 0 : index
    %3 = vector.load %arg4[%c0_3, %c0_4] : memref<1x128xf32, #tpu.memory_space<vmem>>, vector<1x128xf32>
    %c0_5 = arith.constant 0 : index
    %c0_6 = arith.constant 0 : index
    %4 = vector.load %arg5[%c0_5, %c0_6] : memref<16x1xf32, #tpu.memory_space<vmem>>, vector<16x1xf32>
    %c0_7 = arith.constant 0 : index
    %c0_8 = arith.constant 0 : index
    %5 = vector.load %arg6[%c0_7, %c0_8] : memref<16x1xf32, #tpu.memory_space<vmem>>, vector<16x1xf32>
    %6 = vector.broadcast %3 : vector<1x128xf32> to vector<16x128xf32>
    %7 = arith.mulf %2, %6 : vector<16x128xf32>
    %8 = vector.broadcast %5 : vector<16x1xf32> to vector<16x128xf32>
    %9 = arith.mulf %7, %8 : vector<16x128xf32>
    %cst_9 = arith.constant -1.000000e+00 : f32
    %cst_10 = arith.constant 1.000000e+00 : f32
    %10 = vector.broadcast %cst_9 : f32 to vector<16x128xf32>
    %11 = arith.maximumf %10, %9 : vector<16x128xf32>
    %12 = vector.broadcast %cst_10 : f32 to vector<16x128xf32>
    %13 = arith.minimumf %12, %11 : vector<16x128xf32>
    %cst_11 = arith.constant 2.000000e+00 : f32
    %14 = vector.broadcast %cst_11 : f32 to vector<16x128xf32>
    %15 = arith.mulf %14, %13 : vector<16x128xf32>
    %16 = arith.mulf %15, %13 : vector<16x128xf32>
    %cst_12 = arith.constant 1.000000e+00 : f32
    %17 = vector.broadcast %cst_12 : f32 to vector<16x128xf32>
    %18 = arith.subf %16, %17 : vector<16x128xf32>
    %cst_13 = arith.constant 1.79489656E-9 : f32
    %19 = vector.broadcast %cst_13 : f32 to vector<16x128xf32>
    %20 = arith.cmpf ole, %13, %19 : vector<16x128xf32>
    %21 = arith.extui %20 : vector<16x128xi1> to vector<16x128xi32>
    %22 = arith.sitofp %21 : vector<16x128xi32> to vector<16x128xf32>
    %cst_14 = arith.constant -1.000000e+00 : f32
    %23 = vector.broadcast %cst_14 : f32 to vector<16x128xf32>
    %24 = arith.cmpf ole, %13, %23 : vector<16x128xf32>
    %25 = arith.extui %24 : vector<16x128xi1> to vector<16x128xi32>
    %26 = arith.sitofp %25 : vector<16x128xi32> to vector<16x128xf32>
    %27 = arith.addf %22, %26 : vector<16x128xf32>
    %28 = arith.subf %22, %26 : vector<16x128xf32>
    %cst_15 = arith.constant 2.000000e+00 : f32
    %29 = vector.broadcast %cst_15 : f32 to vector<16x128xf32>
    %30 = arith.mulf %29, %28 : vector<16x128xf32>
    %cst_16 = arith.constant 1.000000e+00 : f32
    %31 = vector.broadcast %cst_16 : f32 to vector<16x128xf32>
    %32 = arith.subf %31, %30 : vector<16x128xf32>
    %33 = arith.mulf %32, %18 : vector<16x128xf32>
    %cst_17 = arith.constant 2.000000e+00 : f32
    %34 = vector.broadcast %cst_17 : f32 to vector<16x128xf32>
    %35 = arith.mulf %34, %27 : vector<16x128xf32>
    %36 = arith.subf %33, %35 : vector<16x128xf32>
    %37 = vector.broadcast %4 : vector<16x1xf32> to vector<16x128xf32>
    %38 = arith.mulf %13, %37 : vector<16x128xf32>
    %c0_18 = arith.constant 0 : index
    %c0_19 = arith.constant 0 : index
    %39 = vector.load %arg7[%c0_18, %c0_19] : memref<16x128xf32, #tpu.memory_space<vmem>>, vector<16x128xf32>
    tpu.vector_store %arg7[%c0_18, %c0_19], %38 {strides = array<i32>} : memref<16x128xf32, #tpu.memory_space<vmem>>, vector<16x128xf32>,
    %40 = vector.broadcast %4 : vector<16x1xf32> to vector<16x128xf32>
    %41 = arith.mulf %36, %40 : vector<16x128xf32>
    %c0_20 = arith.constant 0 : index
    %c0_21 = arith.constant 0 : index
    %42 = vector.load %arg8[%c0_20, %c0_21] : memref<16x128xf32, #tpu.memory_space<vmem>>, vector<16x128xf32>
    tpu.vector_store %arg8[%c0_20, %c0_21], %41 {strides = array<i32>} : memref<16x128xf32, #tpu.memory_space<vmem>>, vector<16x128xf32>,
    return
  }
  func.func @transform_0(%arg0: i32, %arg1: i32) -> (i32, i32) {
    %c0_i32 = arith.constant 0 : i32
    %c0_i32_0 = arith.constant 0 : i32
    return %arg0, %c0_i32 : i32, i32
  }
  func.func @transform_1(%arg0: i32, %arg1: i32) -> (i32, i32) {
    %c0_i32 = arith.constant 0 : i32
    %c0_i32_0 = arith.constant 0 : i32
    return %c0_i32, %arg1 : i32, i32
  }
  func.func @transform_2(%arg0: i32, %arg1: i32) -> (i32, i32) {
    %c0_i32 = arith.constant 0 : i32
    %c0_i32_0 = arith.constant 0 : i32
    return %c0_i32, %arg1 : i32, i32
  }
  func.func @transform_3(%arg0: i32, %arg1: i32) -> (i32, i32) {
    %c0_i32 = arith.constant 0 : i32
    %c0_i32_0 = arith.constant 0 : i32
    return %arg0, %c0_i32 : i32, i32
  }
  func.func @transform_4(%arg0: i32, %arg1: i32) -> (i32, i32) {
    %c0_i32 = arith.constant 0 : i32
    %c0_i32_0 = arith.constant 0 : i32
    return %arg0, %c0_i32 : i32, i32
  }
  func.func @transform_5(%arg0: i32, %arg1: i32) -> (i32, i32) {
    %c0_i32 = arith.constant 0 : i32
    return %arg0, %arg1 : i32, i32
  }
  func.func @transform_6(%arg0: i32, %arg1: i32) -> (i32, i32) {
    %c0_i32 = arith.constant 0 : i32
    return %arg0, %arg1 : i32, i32
  }
}

</mosaic_0001>

<llo_original>
// kernel: tpu_custom_call.1
$region0: #{tpu_custom_call.1}
  #allocation0 [shape = 'u32[]', space=smem, size = 0x4, offset = 0x4, fixed_abs, tag = 'smem constant byte address 0x4 - core index']
  #allocation1 [shape = 'u32[144,128]{1,0:T(1,128)}', space=vmem, size = 0x12000, scoped, tag = 'internal scratch']
  %s0 = inlined_call_operand.vmem [shape: f32[16,32], index: 0, kind: input, shape index: {}]
  %s1 = inlined_call_operand.hbm [shape: f32[32,384], index: 1, kind: input, shape index: {}]
  %s2 = inlined_call_operand.vmem [shape: f32[1,384], index: 2, kind: input, shape index: {}]
  %s3 = inlined_call_operand.vmem [shape: f32[16,1], index: 3, kind: input, shape index: {}]
  %s4 = inlined_call_operand.vmem [shape: f32[16,1], index: 4, kind: input, shape index: {}]
  %s5 = inlined_call_operand.hbm [shape: f32[16,384], index: 5, kind: output, shape index: {0}]
  %s6 = inlined_call_operand.hbm [shape: f32[16,384], index: 6, kind: output, shape index: {1}]
  %7 = xla_tuple %s5, %s6
  %s8 = sld [smem:[#allocation0]]
  $region65: #{tpu_custom_call.1} parent=0
    _
  %s10 = ssub.s32 1, %s8
  %s11 = scalar_select 0, %s10, %s8
  $region1: #{tpu_custom_call.1} parent=0
    #allocation2 [shape = 'u8[32768]{0}', space=vmem, size = 0x8000, scoped, tag = 'input window, operand 1']
    #allocation3 [shape = 's32[2]{0}', space=sflag, size = 0x8, scoped, tag = 'scoped memory for tpu_custom_call.1']
    #allocation4 [shape = 's32[2]{0}', space=sflag, size = 0x8, scoped, tag = 'scoped memory for tpu_custom_call.1']
    #allocation5 [shape = 'u8[16384]{0}', space=vmem, size = 0x4000, scoped, tag = 'output window, operand 0']
    #allocation6 [shape = 'u8[16384]{0}', space=vmem, size = 0x4000, scoped, tag = 'output window, operand 1']
    #allocation7 [shape = 's32[2]{0}', space=sflag, size = 0x8, scoped, tag = 'scoped memory for tpu_custom_call.1']
    %12 = vsyncpa [#allocation3], 0
    %s13 = scalar_lea.sflag [#allocation3], 1
    %14 = vsyncpa %s13, 0
    %15 = vsyncpa [#allocation4], 0
    %s16 = scalar_lea.sflag [#allocation4], 1
    %17 = vsyncpa %s16, 0
    %18 = vsyncpa [#allocation7], 0
    %s19 = scalar_lea.sflag [#allocation7], 1
    %20 = vsyncpa %s19, 0
    loop: start=0, step=1, limit=5
    $region2: #{tpu_custom_call.1} parent=1 // loop_pre_header
      _
    $region3: #{tpu_custom_call.1} parent=1 // loop_header
      %s22 = sphi 0, %s26
      %p23 = scmp.ge.s32.totalorder %s22, 5
      %s29 = sphi 0, %s41
      %s30 = sphi 0, %s37
      %s31 = sphi 0, %s29
      %s32 = sphi 0, %s30
      %s33 = sphi 0, %s31
      %s34 = sphi 0, %s32
      %s44 = sphi 0, %s46
      %s47 = sphi 0, %s44
      %s48 = sphi 0, %s47
      %s64 = sphi 0, %s48
      %s70 = sphi 0, %s72
      %s73 = sphi 0, %s70
      %s74 = sphi 0, %s73
      %s90 = sphi 0, %s74
      %s96 = sphi 0, %s98
      %s99 = sphi 0, %s96
      %s100 = sphi 0, %s99
      %s116 = sphi 0, %s100
      %s122 = sphi 0, %s124
      %s125 = sphi 0, %s122
      %s126 = sphi 0, %s125
      %s142 = sphi 0, %s126
      %s148 = sphi 0, %s150
      %s151 = sphi 0, %s148
      %s152 = sphi 0, %s151
      %s168 = sphi 0, %s152
      %s176 = sphi 0, %s178
      %s179 = sphi 0, %s176
      %s180 = sphi 0, %s179
      %s196 = sphi 0, %s180
      %s204 = sphi 0, %s206
      %s207 = sphi 0, %s204
      %s208 = sphi 0, %s207
      %s224 = sphi 0, %s208
    $region4: #{tpu_custom_call.1} parent=1 // loop_header_branch
      %25 = sbr.rel (%p23) target = $region8
    $region5: #{tpu_custom_call.1} parent=1 // loop_body
      %s27 = ssub.s32 %s22, 1
      %s28 = ssub.s32 %s22, 2
      %s35 = sadd.s32 1, %s30
      %p36 = scmp.ge.s32.totalorder %s35, 3
      %s37 = scalar_select %p36, 0, %s35
      %s38 = sadd.s32 1, %s29
      %s39 = scalar_select %p36, %s38, %s29
      %p40 = scmp.ge.s32.totalorder %s39, 1
      %s41 = scalar_select %p40, 0, %s39
      %s42 = ssub.s32 %s29, %s41
      %p43 = scmp.eq.s32.totalorder %s42, 0
      %s45 = sadd.s32 %s44, 1
      %s46 = scalar_select %p43, %s44, %s45
      %p49 = pneg %p43
      %p50 = scmp.eq.s32.totalorder %s22, 2
      %p51 = por %p49, %p50
      %p52 = scmp.ne.s32.totalorder %s44, %s47
      %p53 = scmp.eq.s32.totalorder %s22, 0
      %p54 = por %p52, %p53
      %p55 = scmp.ne.s32.totalorder %s44, %s47
      %p56 = scmp.eq.s32.totalorder %s27, 2
      %p57 = por %p55, %p56
      %p58 = scmp.ne.s32.totalorder %s47, %s48
      %p59 = scmp.eq.s32.totalorder %s27, 0
      %p60 = por %p58, %p59
      %p61 = scmp.ne.s32.totalorder %s47, %s48
      %p62 = scmp.eq.s32.totalorder %s28, 2
      %p63 = por %p61, %p62
      %p65 = scmp.ne.s32.totalorder %s48, %s64
      %p66 = scmp.eq.s32.totalorder %s28, 0
      %p67 = por %p65, %p66
      %s68 = ssub.s32 %s30, %s37
      %p69 = scmp.eq.s32.totalorder %s68, 0
      %s71 = sadd.s32 %s70, 1
      %s72 = scalar_select %p69, %s70, %s71
      %p75 = pneg %p69
      %p76 = scmp.eq.s32.totalorder %s22, 2
      %p77 = por %p75, %p76
      %p78 = scmp.ne.s32.totalorder %s70, %s73
      %p79 = scmp.eq.s32.totalorder %s22, 0
      %p80 = por %p78, %p79
      %p81 = scmp.ne.s32.totalorder %s70, %s73
      %p82 = scmp.eq.s32.totalorder %s27, 2
      %p83 = por %p81, %p82
      %p84 = scmp.ne.s32.totalorder %s73, %s74
      %p85 = scmp.eq.s32.totalorder %s27, 0
      %p86 = por %p84, %p85
      %p87 = scmp.ne.s32.totalorder %s73, %s74
      %p88 = scmp.eq.s32.totalorder %s28, 2
      %p89 = por %p87, %p88
      %p91 = scmp.ne.s32.totalorder %s74, %s90
      %p92 = scmp.eq.s32.totalorder %s28, 0
      %p93 = por %p91, %p92
      %s94 = ssub.s32 %s30, %s37
      %p95 = scmp.eq.s32.totalorder %s94, 0
      %s97 = sadd.s32 %s96, 1
      %s98 = scalar_select %p95, %s96, %s97
      %p101 = pneg %p95
      %p102 = scmp.eq.s32.totalorder %s22, 2
      %p103 = por %p101, %p102
      %p104 = scmp.ne.s32.totalorder %s96, %s99
      %p105 = scmp.eq.s32.totalorder %s22, 0
      %p106 = por %p104, %p105
      %p107 = scmp.ne.s32.totalorder %s96, %s99
      %p108 = scmp.eq.s32.totalorder %s27, 2
      %p109 = por %p107, %p108
      %p110 = scmp.ne.s32.totalorder %s99, %s100
      %p111 = scmp.eq.s32.totalorder %s27, 0
      %p112 = por %p110, %p111
      %p113 = scmp.ne.s32.totalorder %s99, %s100
      %p114 = scmp.eq.s32.totalorder %s28, 2
      %p115 = por %p113, %p114
      %p117 = scmp.ne.s32.totalorder %s100, %s116
      %p118 = scmp.eq.s32.totalorder %s28, 0
      %p119 = por %p117, %p118
      %s120 = ssub.s32 %s29, %s41
      %p121 = scmp.eq.s32.totalorder %s120, 0
      %s123 = sadd.s32 %s122, 1
      %s124 = scalar_select %p121, %s122, %s123
      %p127 = pneg %p121
      %p128 = scmp.eq.s32.totalorder %s22, 2
      %p129 = por %p127, %p128
      %p130 = scmp.ne.s32.totalorder %s122, %s125
      %p131 = scmp.eq.s32.totalorder %s22, 0
      %p132 = por %p130, %p131
      %p133 = scmp.ne.s32.totalorder %s122, %s125
      %p134 = scmp.eq.s32.totalorder %s27, 2
      %p135 = por %p133, %p134
      %p136 = scmp.ne.s32.totalorder %s125, %s126
      %p137 = scmp.eq.s32.totalorder %s27, 0
      %p138 = por %p136, %p137
      %p139 = scmp.ne.s32.totalorder %s125, %s126
      %p140 = scmp.eq.s32.totalorder %s28, 2
      %p141 = por %p139, %p140
      %p143 = scmp.ne.s32.totalorder %s126, %s142
      %p144 = scmp.eq.s32.totalorder %s28, 0
      %p145 = por %p143, %p144
      %s146 = ssub.s32 %s29, %s41
      %p147 = scmp.eq.s32.totalorder %s146, 0
      %s149 = sadd.s32 %s148, 1
      %s150 = scalar_select %p147, %s148, %s149
      %p153 = pneg %p147
      %p154 = scmp.eq.s32.totalorder %s22, 2
      %p155 = por %p153, %p154
      %p156 = scmp.ne.s32.totalorder %s148, %s151
      %p157 = scmp.eq.s32.totalorder %s22, 0
      %p158 = por %p156, %p157
      %p159 = scmp.ne.s32.totalorder %s148, %s151
      %p160 = scmp.eq.s32.totalorder %s27, 2
      %p161 = por %p159, %p160
      %p162 = scmp.ne.s32.totalorder %s151, %s152
      %p163 = scmp.eq.s32.totalorder %s27, 0
      %p164 = por %p162, %p163
      %p165 = scmp.ne.s32.totalorder %s151, %s152
      %p166 = scmp.eq.s32.totalorder %s28, 2
      %p167 = por %p165, %p166
      %p169 = scmp.ne.s32.totalorder %s152, %s168
      %p170 = scmp.eq.s32.totalorder %s28, 0
      %p171 = por %p169, %p170
      %s172 = ssub.s32 %s29, %s41
      %s173 = ssub.s32 %s30, %s37
      %s174 = sor.u32 %s172, %s173
      %p175 = scmp.eq.s32.totalorder %s174, 0
      %s177 = sadd.s32 %s176, 1
      %s178 = scalar_select %p175, %s176, %s177
      %p181 = pneg %p175
      %p182 = scmp.eq.s32.totalorder %s22, 2
      %p183 = por %p181, %p182
      %p184 = scmp.ne.s32.totalorder %s176, %s179
      %p185 = scmp.eq.s32.totalorder %s22, 0
      %p186 = por %p184, %p185
      %p187 = scmp.ne.s32.totalorder %s176, %s179
      %p188 = scmp.eq.s32.totalorder %s27, 2
      %p189 = por %p187, %p188
      %p190 = scmp.ne.s32.totalorder %s179, %s180
      %p191 = scmp.eq.s32.totalorder %s27, 0
      %p192 = por %p190, %p191
      %p193 = scmp.ne.s32.totalorder %s179, %s180
      %p194 = scmp.eq.s32.totalorder %s28, 2
      %p195 = por %p193, %p194
      %p197 = scmp.ne.s32.totalorder %s180, %s196
      %p198 = scmp.eq.s32.totalorder %s28, 0
      %p199 = por %p197, %p198
      %s200 = ssub.s32 %s29, %s41
      %s201 = ssub.s32 %s30, %s37
      %s202 = sor.u32 %s200, %s201
      %p203 = scmp.eq.s32.totalorder %s202, 0
      %s205 = sadd.s32 %s204, 1
      %s206 = scalar_select %p203, %s204, %s205
      %p209 = pneg %p203
      %p210 = scmp.eq.s32.totalorder %s22, 2
      %p211 = por %p209, %p210
      %p212 = scmp.ne.s32.totalorder %s204, %s207
      %p213 = scmp.eq.s32.totalorder %s22, 0
      %p214 = por %p212, %p213
      %p215 = scmp.ne.s32.totalorder %s204, %s207
      %p216 = scmp.eq.s32.totalorder %s27, 2
      %p217 = por %p215, %p216
      %p218 = scmp.ne.s32.totalorder %s207, %s208
      %p219 = scmp.eq.s32.totalorder %s27, 0
      %p220 = por %p218, %p219
      %p221 = scmp.ne.s32.totalorder %s207, %s208
      %p222 = scmp.eq.s32.totalorder %s28, 2
      %p223 = por %p221, %p222
      %p225 = scmp.ne.s32.totalorder %s208, %s224
      %p226 = scmp.eq.s32.totalorder %s28, 0
      %p227 = por %p225, %p226
      %p228 = scmp.le.s32.totalorder 1, %s22
      %p229 = scmp.lt.s32.totalorder %s22, 4
      %p230 = pnand %p228, %p229
      %p231 = pneg %p230
      // Predicated region
      $region9: #{tpu_custom_call.1} parent=5 // pred_check
        _
      $region10: #{tpu_custom_call.1} parent=5 // pred_check_branch
        %233 = sbr.rel (%p230) target = $region12
      $region11: #{tpu_custom_call.1} parent=5 // pred_region
        %s234 = ssub.s32 %s22, 1
        // Predicated region
        $region13: #{tpu_custom_call.1} parent=11 // pred_check
          %p235 = pneg %p60
        $region14: #{tpu_custom_call.1} parent=11 // pred_check_branch
          %237 = sbr.rel (%p235) target = $region16
        $region15: #{tpu_custom_call.1} parent=11 // pred_region
          %s238 = smul.u32 2, %s31
          %p239 = scmp.lt.s32.totalorder %s238, 1
          %s240 = scalar_select %p239, %s238, 1
          %s241 = smul.addr %s240, 8
          %s242 = scalar_lea.vmem %s0, %s241
          %s243 = smul.u32 2, %s31
        $region16: #{tpu_custom_call.1} parent=11 // pred_fallthru
          _
        // Predicated region
        $region17: #{tpu_custom_call.1} parent=11 // pred_check
          %p244 = pneg %p138
        $region18: #{tpu_custom_call.1} parent=11 // pred_check_branch
          %246 = sbr.rel (%p244) target = $region20
        $region19: #{tpu_custom_call.1} parent=11 // pred_region
          %s247 = smul.u32 2, %s31
          %p248 = scmp.lt.s32.totalorder %s247, 1
          %s249 = scalar_select %p248, %s247, 1
          %s250 = smul.addr %s249, 8
          %s251 = scalar_lea.vmem %s3, %s250
          %s252 = smul.u32 2, %s31
        $region20: #{tpu_custom_call.1} parent=11 // pred_fallthru
          _
        // Predicated region
        $region21: #{tpu_custom_call.1} parent=11 // pred_check
          %p253 = pneg %p164
        $region22: #{tpu_custom_call.1} parent=11 // pred_check_branch
          %255 = sbr.rel (%p253) target = $region24
        $region23: #{tpu_custom_call.1} parent=11 // pred_region
          %s256 = smul.u32 2, %s31
          %p257 = scmp.lt.s32.totalorder %s256, 1
          %s258 = scalar_select %p257, %s256, 1
          %s259 = smul.addr %s258, 8
          %s260 = scalar_lea.vmem %s4, %s259
          %s261 = smul.u32 2, %s31
        $region24: #{tpu_custom_call.1} parent=11 // pred_fallthru
          _
      $region12: #{tpu_custom_call.1} parent=5 // pred_fallthru
        _
      %p262 = scmp.lt.s32.totalorder %s22, 3
      // Predicated region
      $region25: #{tpu_custom_call.1} parent=5 // pred_check
        %p263 = pneg %p262
      $region26: #{tpu_custom_call.1} parent=5 // pred_check_branch
        %265 = sbr.rel (%p263) target = $region28
      $region27: #{tpu_custom_call.1} parent=5 // pred_region
        // Predicated region
        $region29: #{tpu_custom_call.1} parent=27 // pred_check
          %p266 = pneg %p80
        $region30: #{tpu_custom_call.1} parent=27 // pred_check_branch
          %268 = sbr.rel (%p266) target = $region32
        $region31: #{tpu_custom_call.1} parent=27 // pred_region
          %s269 = sand.u32 %s70, 1
          %s270 = scalar_lea.sflag [#allocation3], %s269
          %s271 = sand.u32 %s70, 1
          %s272 = smul.addr %s271, 32
          %s273 = scalar_lea.vmem [#allocation2], %s272
          %s275 = ssub.s32 512, 512
          %276 = vsyncadd %s270, %s275
          %s277 = smul.addr %s30, 128
          %s278 = scalar_lea.hbm %s1, %s277
          %s279 = sshll.u32 %s273, 4
          %s280 = int_to_ptr.vmem [resolvable:$true] %s279
          %285 = dma.hbm_to_vmem [thread:$0]  %s278, 512, %s280, %s270, 384, 128, 8
        $region32: #{tpu_custom_call.1} parent=27 // pred_fallthru
          _
        // Predicated region
        $region33: #{tpu_custom_call.1} parent=27 // pred_check
          %p286 = pneg %p106
        $region34: #{tpu_custom_call.1} parent=27 // pred_check_branch
          %288 = sbr.rel (%p286) target = $region36
        $region35: #{tpu_custom_call.1} parent=27 // pred_region
          %p289 = scmp.lt.s32.totalorder %s30, 2
          %s290 = scalar_select %p289, %s30, 2
          %s291 = scalar_lea.vmem %s2, %s290
        $region36: #{tpu_custom_call.1} parent=27 // pred_fallthru
          _
      $region28: #{tpu_custom_call.1} parent=5 // pred_fallthru
        _
      %p292 = scmp.le.s32.totalorder 1, %s22
      %p293 = scmp.lt.s32.totalorder %s22, 4
      %p294 = pnand %p292, %p293
      %p295 = pneg %p294
      // Predicated region
      $region37: #{tpu_custom_call.1} parent=5 // pred_check
        _
      $region38: #{tpu_custom_call.1} parent=5 // pred_check_branch
        %297 = sbr.rel (%p294) target = $region40
      $region39: #{tpu_custom_call.1} parent=5 // pred_region
        %s298 = ssub.s32 %s22, 1
        %s299 = sand.u32 %s73, 1
        %s300 = scalar_lea.sflag [#allocation3], %s299
        %s301 = sand.u32 %s73, 1
        %s302 = smul.addr %s301, 32
        %s303 = scalar_lea.vmem [#allocation2], %s302
        // Predicated region
        $region41: #{tpu_custom_call.1} parent=39 // pred_check
          %p304 = pneg %p86
        $region42: #{tpu_custom_call.1} parent=39 // pred_check_branch
          %306 = sbr.rel (%p304) target = $region44
        $region43: #{tpu_custom_call.1} parent=39 // pred_region
          %307 = dma.done %s300, 512
        $region44: #{tpu_custom_call.1} parent=39 // pred_fallthru
          _
        %s308 = smul.u32 2, %s31
        %p309 = scmp.lt.s32.totalorder %s308, 1
        %s310 = scalar_select %p309, %s308, 1
        %s311 = smul.addr %s310, 8
        %s312 = scalar_lea.vmem %s0, %s311
        %p313 = pneg %p60
        %p314 = pneg %p57
        %s315 = sand.u32 %s73, 1
        %s316 = scalar_lea.sflag [#allocation3], %s315
        %s317 = sand.u32 %s73, 1
        %s318 = smul.addr %s317, 32
        %s319 = scalar_lea.vmem [#allocation2], %s318
        %p320 = pneg %p86
        %p321 = pneg %p83
        %p322 = scmp.lt.s32.totalorder %s32, 2
        %s323 = scalar_select %p322, %s32, 2
        %s324 = scalar_lea.vmem %s2, %s323
        %p325 = pneg %p112
        %p326 = pneg %p109
        %s327 = smul.u32 2, %s31
        %p328 = scmp.lt.s32.totalorder %s327, 1
        %s329 = scalar_select %p328, %s327, 1
        %s330 = smul.addr %s329, 8
        %s331 = scalar_lea.vmem %s3, %s330
        %p332 = pneg %p138
        %p333 = pneg %p135
        %s334 = smul.u32 2, %s31
        %p335 = scmp.lt.s32.totalorder %s334, 1
        %s336 = scalar_select %p335, %s334, 1
        %s337 = smul.addr %s336, 8
        %s338 = scalar_lea.vmem %s4, %s337
        %p339 = pneg %p164
        %p340 = pneg %p161
        %p341 = pneg %p192
        %p342 = pneg %p189
        %s343 = sand.u32 %s179, 1
        %s344 = scalar_lea.sflag [#allocation4], %s343
        %s345 = sand.u32 %s179, 1
        %s346 = smul.addr %s345, 16
        %s347 = scalar_lea.vmem [#allocation5], %s346
        %p348 = pneg %p220
        %p349 = pneg %p217
        %s350 = sand.u32 %s207, 1
        %s351 = scalar_lea.sflag [#allocation7], %s350
        %s352 = sand.u32 %s207, 1
        %s353 = smul.addr %s352, 16
        %s354 = scalar_lea.vmem [#allocation6], %s353
        %s355 = smul.u32 2, %s31
        %p356 = scmp.lt.s32.totalorder %s355, 1
        %s357 = scalar_select %p356, %s355, 1
        %s358 = smul.addr %s357, 8
        %s359 = scalar_lea.vmem %s0, %s358
        %s360 = smul.u32 2, %s31
        %p361 = scmp.lt.s32.totalorder %s32, 2
        %s362 = scalar_select %p361, %s32, 2
        %s363 = scalar_lea.vmem %s2, %s362
        %s364 = smul.u32 2, %s31
        %p365 = scmp.lt.s32.totalorder %s364, 1
        %s366 = scalar_select %p365, %s364, 1
        %s367 = smul.addr %s366, 8
        %s368 = scalar_lea.vmem %s3, %s367
        %s369 = smul.u32 2, %s31
        %s370 = smul.u32 2, %s31
        %p371 = scmp.lt.s32.totalorder %s370, 1
        %s372 = scalar_select %p371, %s370, 1
        %s373 = smul.addr %s372, 8
        %s374 = scalar_lea.vmem %s4, %s373
        %s375 = smul.u32 2, %s31
        %s376 = smul.u32 2, %s31
        %s377 = smul.u32 2, %s31
        %v378 = vld [vmem:[%s359] sm:$0xff]
        %v379 = vld [vmem:[%s359 + $0x8] sm:$0xff]
        %v380 = vld [vmem:[%s303] sm:$0xff]
        %v381 = vld [vmem:[%s303 + $0x8] sm:$0xff]
        %v382 = vld [vmem:[%s303 + $0x10] sm:$0xff]
        %v383 = vld [vmem:[%s303 + $0x18] sm:$0xff]
        %vm384 = vcmask 261120
        %v386 = vsel %vm384, %v378, 0
        %v389 = vsel %vm384, %v379, 0
        %391 = vmatprep.subr.mxu0 0.0
        %392 = vmatpush1.msra.mxu0 %v380
        %393 = vmatprep.subr.mxu0 0.0
        %394 = vmatpush1.msra.mxu0 %v381
        %395 = vmatprep.subr.mxu0 0.0
        %396 = vmatpush1.msra.mxu0 %v382
        %397 = vmatprep.subr.mxu0 0.0
        %398 = vmatpush1.msra.mxu0 %v383
        %399 = vmatprep.subr.mxu0 0.0
        %400 = vmatpush1.msra.mxu0 0.0
        %401 = vmatprep.subr.mxu0 0.0
        %402 = vmatpush1.msra.mxu0 0.0
        %403 = vmatprep.subr.mxu0 0.0
        %404 = vmatpush1.msra.mxu0 0.0
        %405 = vmatprep.subr.mxu0 0.0
        %406 = vmatpush1.msra.mxu0 0.0
        %407 = vmatprep.subr.mxu0 0.0
        %408 = vmatpush1.msra.mxu0 0.0
        %409 = vmatprep.subr.mxu0 0.0
        %410 = vmatpush1.msra.mxu0 0.0
        %411 = vmatprep.subr.mxu0 0.0
        %412 = vmatpush1.msra.mxu0 0.0
        %413 = vmatprep.subr.mxu0 0.0
        %414 = vmatpush1.msra.mxu0 0.0
        %415 = vmatprep.subr.mxu0 0.0
        %416 = vmatpush1.msra.mxu0 0.0
        %417 = vmatprep.subr.mxu0 0.0
        %418 = vmatpush1.msra.mxu0 0.0
        %419 = vmatprep.subr.mxu0 0.0
        %420 = vmatpush1.msra.mxu0 0.0
        %421 = vmatprep.subr.mxu0 0.0
        %422 = vmatpush1.msra.mxu0 0.0
        %423 = vmatprep.subr.mxu0 0.0
        %424 = vmatpush1.msra.mxu0 0.0
        %425 = vmatprep.subr.mxu0 0.0
        %426 = vmatpush1.msra.mxu0 0.0
        %427 = vmatprep.subr.mxu0 0.0
        %428 = vmatpush1.msra.mxu0 0.0
        %429 = vmatprep.subr.mxu0 0.0
        %430 = vmatpush1.msra.mxu0 0.0
        %431 = vmatprep.subr.mxu0 0.0
        %432 = vmatpush1.msra.mxu0 0.0
        %433 = vmatprep.subr.mxu0 0.0
        %434 = vmatpush1.msra.mxu0 0.0
        %435 = vmatprep.subr.mxu0 0.0
        %436 = vmatpush1.msra.mxu0 0.0
        %437 = vmatprep.subr.mxu0 0.0
        %438 = vmatpush1.msra.mxu0 0.0
        %439 = vmatprep.subr.mxu0 0.0
        %440 = vmatpush1.msra.mxu0 0.0
        %441 = vmatprep.subr.mxu0 0.0
        %442 = vmatpush1.msra.mxu0 0.0
        %443 = vmatprep.subr.mxu0 0.0
        %444 = vmatpush1.msra.mxu0 0.0
        %445 = vmatprep.subr.mxu0 0.0
        %446 = vmatpush1.msra.mxu0 0.0
        %447 = vmatprep.subr.mxu0 0.0
        %448 = vmatpush1.msra.mxu0 0.0
        %449 = vmatprep.subr.mxu0 0.0
        %450 = vmatpush1.msra.mxu0 0.0
        %451 = vmatprep.subr.mxu0 0.0
        %452 = vmatpush1.msra.mxu0 0.0
        %453 = vmatprep.subr.mxu0 0.0
        %454 = vmatpush1.msra.mxu0 0.0
        %455 = vmatprep.mubr.f32.mxu0 0.0
        %456 = vmatmul.mubr.f32.gmra.mrb[0].mxu0 %v386
        %v457 = vpop.f32.mrb[0].mxu0
        %v458 = vadd.f32 0.0, %v457
        %v459 = vpop.f32.mrb[0].mxu0
        %460 = vmatprep.mubr.f32.mxu0 0.0
        %461 = vmatmul.mubr.f32.gmra.mrb[0].mxu0 %v389
        %v462 = vpop.f32.mrb[0].mxu0
        %v463 = vadd.f32 0.0, %v462
        %v464 = vpop.f32.mrb[0].mxu0
        %465 = vdwg.mxu0
        %v466 = vld [vmem:[%s363] sm:$0x1]
        %v467 = vld [vmem:[%s368] sm:$0xff]
        %v468 = vld [vmem:[%s368 + $0x8] sm:$0xff]
        %v469 = vld [vmem:[%s374] sm:$0xff]
        %v470 = vld [vmem:[%s374 + $0x8] sm:$0xff]
        %v472 = vlaneseq
        %v473 = vshrl.u32 %v472, 7
        %v474 = vsub.s32 0, %v473
        %v475 = vrot.slane %v466, %v474
        %v477 = vmul.f32 %v458, %v475
        %v478 = vmul.f32 %v463, %v475
        %480 = vset.pattern.permute.xlu0 0
        %481 = vperm.xlu0 %480, %v469
        %v482 = vpop.permute.xlu0 %481
        %485 = vset.pattern.permute.xlu0 0
        %486 = vperm.xlu0 %485, %v470
        %v487 = vpop.permute.xlu0 %486
        %v489 = vmul.f32 %v477, %v482
        %v490 = vmul.f32 %v478, %v487
        %v491 = vmax.f32 %v489, -1.0
        %v492 = vmax.f32 %v490, -1.0
        %v493 = vmin.f32 %v491, 1.0
        %v494 = vmin.f32 %v492, 1.0
        %v495 = vmul.f32 %v493, 2.0
        %v496 = vmul.f32 %v494, 2.0
        %v497 = vmul.f32 %v495, %v493
        %v498 = vmul.f32 %v496, %v494
        %v499 = vsub.f32 %v497, 1.0
        %v500 = vsub.f32 %v498, 1.0
        %vm501 = vcmp.le.f32.partialorder %v493, 1.7948966e-09
        %vm502 = vcmp.le.f32.partialorder %v494, 1.7948966e-09
        %v503 = vsel %vm501, 1, 0
        %v504 = vsel %vm502, 1, 0
        %v505 = vcvt.s32.f32 %v503
        %v506 = vcvt.s32.f32 %v504
        %vm507 = vcmp.le.f32.partialorder %v493, -1.0
        %vm508 = vcmp.le.f32.partialorder %v494, -1.0
        %v509 = vsel %vm507, 1, 0
        %v510 = vsel %vm508, 1, 0
        %v511 = vcvt.s32.f32 %v509
        %v512 = vcvt.s32.f32 %v510
        %v513 = vadd.f32 %v505, %v511
        %v514 = vadd.f32 %v506, %v512
        %v515 = vsub.f32 %v505, %v511
        %v516 = vsub.f32 %v506, %v512
        %v517 = vmul.f32 %v515, 2.0
        %v518 = vmul.f32 %v516, 2.0
        %v519 = vsub.f32 1.0, %v517
        %v520 = vsub.f32 1.0, %v518
        %v521 = vmul.f32 %v519, %v499
        %v522 = vmul.f32 %v520, %v500
        %v523 = vmul.f32 %v513, 2.0
        %v524 = vmul.f32 %v514, 2.0
        %v525 = vsub.f32 %v521, %v523
        %v526 = vsub.f32 %v522, %v524
        %528 = vset.pattern.permute.xlu0 0
        %529 = vperm.xlu0 %528, %v467
        %v530 = vpop.permute.xlu0 %529
        %533 = vset.pattern.permute.xlu0 0
        %534 = vperm.xlu0 %533, %v468
        %v535 = vpop.permute.xlu0 %534
        %v537 = vmul.f32 %v493, %v530
        %v538 = vmul.f32 %v494, %v535
        %539 = vst [vmem:[%s347] sm:$0xff] %v537
        %540 = vst [vmem:[%s347 + $0x8] sm:$0xff] %v538
        %v541 = vmul.f32 %v525, %v530
        %v542 = vmul.f32 %v526, %v535
        %543 = vst [vmem:[%s354] sm:$0xff] %v541
        %544 = vst [vmem:[%s354 + $0x8] sm:$0xff] %v542
        %s545 = sand.u32 %s179, 1
        %s546 = scalar_lea.sflag [#allocation4], %s545
        %s547 = sand.u32 %s179, 1
        %s548 = smul.addr %s547, 16
        %s549 = scalar_lea.vmem [#allocation5], %s548
        %s550 = sand.u32 %s207, 1
        %s551 = scalar_lea.sflag [#allocation7], %s550
        %s552 = sand.u32 %s207, 1
        %s553 = smul.addr %s552, 16
        %s554 = scalar_lea.vmem [#allocation6], %s553
        // Predicated region
        $region45: #{tpu_custom_call.1} parent=39 // pred_check
          %p555 = pneg %p189
        $region46: #{tpu_custom_call.1} parent=39 // pred_check_branch
          %557 = sbr.rel (%p555) target = $region48
        $region47: #{tpu_custom_call.1} parent=39 // pred_region
          %s558 = smul.u32 2, %s31
          %s560 = ssub.s32 256, 256
          %561 = vsyncadd %s546, %s560
          %s562 = smul.addr %s558, 3
          %s563 = sadd.s32 %s32, %s562
          %s564 = smul.addr %s563, 128
          %s565 = scalar_lea.hbm %s5, %s564
          %s566 = sshll.u32 %s549, 4
          %s567 = int_to_ptr.vmem [resolvable:$true] %s566
          %572 = dma.vmem_to_hbm [thread:$0]  %s567, 256, %s565, %s546, 128, 384, 8
        $region48: #{tpu_custom_call.1} parent=39 // pred_fallthru
          _
        // Predicated region
        $region49: #{tpu_custom_call.1} parent=39 // pred_check
          %p573 = pneg %p217
        $region50: #{tpu_custom_call.1} parent=39 // pred_check_branch
          %575 = sbr.rel (%p573) target = $region52
        $region51: #{tpu_custom_call.1} parent=39 // pred_region
          %s576 = smul.u32 2, %s31
          %s578 = ssub.s32 256, 256
          %579 = vsyncadd %s551, %s578
          %s580 = smul.addr %s576, 3
          %s581 = sadd.s32 %s32, %s580
          %s582 = smul.addr %s581, 128
          %s583 = scalar_lea.hbm %s6, %s582
          %s584 = sshll.u32 %s554, 4
          %s585 = int_to_ptr.vmem [resolvable:$true] %s584
          %590 = dma.vmem_to_hbm [thread:$0]  %s585, 256, %s583, %s551, 128, 384, 8
        $region52: #{tpu_custom_call.1} parent=39 // pred_fallthru
          _
      $region40: #{tpu_custom_call.1} parent=5 // pred_fallthru
        _
      %p591 = scmp.le.s32.totalorder 2, %s22
      // Predicated region
      $region53: #{tpu_custom_call.1} parent=5 // pred_check
        %p592 = pneg %p591
      $region54: #{tpu_custom_call.1} parent=5 // pred_check_branch
        %594 = sbr.rel (%p592) target = $region56
      $region55: #{tpu_custom_call.1} parent=5 // pred_region
        %s595 = ssub.s32 %s22, 2
        // Predicated region
        $region57: #{tpu_custom_call.1} parent=55 // pred_check
          %p596 = pneg %p195
        $region58: #{tpu_custom_call.1} parent=55 // pred_check_branch
          %598 = sbr.rel (%p596) target = $region60
        $region59: #{tpu_custom_call.1} parent=55 // pred_region
          %s599 = sand.u32 %s180, 1
          %s600 = scalar_lea.sflag [#allocation4], %s599
          %s601 = sand.u32 %s180, 1
          %s602 = smul.addr %s601, 16
          %s603 = scalar_lea.vmem [#allocation5], %s602
          %604 = dma.done %s600, 256
        $region60: #{tpu_custom_call.1} parent=55 // pred_fallthru
          _
        // Predicated region
        $region61: #{tpu_custom_call.1} parent=55 // pred_check
          %p605 = pneg %p223
        $region62: #{tpu_custom_call.1} parent=55 // pred_check_branch
          %607 = sbr.rel (%p605) target = $region64
        $region63: #{tpu_custom_call.1} parent=55 // pred_region
          %s608 = sand.u32 %s208, 1
          %s609 = scalar_lea.sflag [#allocation7], %s608
          %s610 = sand.u32 %s208, 1
          %s611 = smul.addr %s610, 16
          %s612 = scalar_lea.vmem [#allocation6], %s611
          %613 = dma.done %s609, 256
        $region64: #{tpu_custom_call.1} parent=55 // pred_fallthru
          _
      $region56: #{tpu_custom_call.1} parent=5 // pred_fallthru
        _
    $region6: #{tpu_custom_call.1} parent=1 // loop_footer
      %s26 = sadd.s32 1, %s22
    $region7: #{tpu_custom_call.1} parent=1 // loop_footer_branch
      %21 = sbr.rel target = $region3
    $region8: #{tpu_custom_call.1} parent=1 // loop_exit
      _
    %614 = vsyncpa [#allocation3], 1
    %s615 = scalar_lea.sflag [#allocation3], 1
    %616 = vsyncpa %s615, 1
    %617 = vsyncpa [#allocation4], 1
    %s618 = scalar_lea.sflag [#allocation4], 1
    %619 = vsyncpa %s618, 1
    %620 = vsyncpa [#allocation7], 1
    %s621 = scalar_lea.sflag [#allocation7], 1
    %622 = vsyncpa %s621, 1

</llo_original>
